<compile_context>
chip_gen: v7x
topology: tpu7x:2x2x1
jax: 0.10.0
libtpu: 0.0.40
codegen_flags: <defaults>
</compile_context>

<pallas_src>
import functools

import jax
import jax.numpy as jnp
from jax.experimental import pallas as pl
from jax.experimental.pallas import tpu as pltpu

NUM_CLASSES = 4


def _round_up(x, m):
    return ((x + m - 1) // m) * m


def maximize_loss_kernel(x_ref, t_ref, m_ref, out_ref, *, batch):
    # x: (C, TB) logits, t: (S, TB) int32 targets, mask: (S, TB) f32 weights.
    x = x_ref[...].astype(jnp.float32)
    t = t_ref[...]
    mask = m_ref[...].astype(jnp.float32)

    # Numerically-stable log-sum-exp over the class (sublane) axis.
    row_max = jnp.max(x, axis=0, keepdims=True)        # (1, TB)
    e = jnp.exp(x - row_max)                            # (C, TB)
    sum_e = jnp.sum(e, axis=0, keepdims=True)           # (1, TB)

    # max_c e_c * (sum_s [t_s == c] * mask_s), class-by-class (C = 4, static loop).
    max_val = None
    for c in range(NUM_CLASSES):
        tgt_c = jnp.sum(jnp.where(t == c, mask, 0.0), axis=0, keepdims=True)  # (1, TB)
        val_c = e[c:c + 1, :] * tgt_c                                          # (1, TB)
        max_val = val_c if max_val is None else jnp.maximum(max_val, val_c)

    # -log(softmax_max) == log(sum_e) - log(max_c e_c * tgt_c)  (row_max cancels).
    neg_log = jnp.log(sum_e) - jnp.log(max_val)          # (1, TB)

    # Zero out the padded lanes so the host-side sum is exact.
    tb = x.shape[1]
    lane = jax.lax.broadcasted_iota(jnp.int32, (1, tb), 1)
    gidx = pl.program_id(0) * tb + lane
    out_ref[...] = jnp.where(gidx < batch, neg_log, 0.0)


def maximize_loss(inputs, target, answer_mask, *, tile_b=None):
    B, C = inputs.shape
    S = target.shape[1]

    # Lane tile over B: multiple of 128, capped at 512 (fits scoped VMEM on all gens).
    if tile_b is None:
        tile_b = min(512, _round_up(max(B, 1), 128))
    Bp = _round_up(B, tile_b)
    pad = Bp - B

    # Transpose so B is the lane (last) dim; pad B up to a tile multiple.
    x_t = jnp.pad(inputs.astype(jnp.float32), ((0, pad), (0, 0))).T          # (C, Bp)
    t_t = jnp.pad(target.astype(jnp.int32), ((0, pad), (0, 0))).T            # (S, Bp)
    m_t = jnp.pad(answer_mask.astype(jnp.float32), ((0, pad), (0, 0)),
                  constant_values=1.0).T                                      # (S, Bp)

    kernel = functools.partial(maximize_loss_kernel, batch=B)
    neg_log = pl.pallas_call(
        kernel,
        out_shape=jax.ShapeDtypeStruct((1, Bp), jnp.float32),
        grid=(Bp // tile_b,),
        in_specs=[
            pl.BlockSpec((C, tile_b), lambda i: (0, i)),
            pl.BlockSpec((S, tile_b), lambda i: (0, i)),
            pl.BlockSpec((S, tile_b), lambda i: (0, i)),
        ],
        out_specs=pl.BlockSpec((1, tile_b), lambda i: (0, i)),
        compiler_params=pltpu.CompilerParams(
            dimension_semantics=("parallel",),
            vmem_limit_bytes=32 * 1024 * 1024,
        ),
    )(x_t, t_t, m_t)

    # Tiny host-side reduction over the lane-dense per-row -log(max_prob) values.
    return jnp.sum(neg_log) / B


def maximize_loss_ref(inputs, target, answer_mask):
    prob = jax.nn.softmax(inputs, axis=1)
    onehot = jax.nn.one_hot(target, NUM_CLASSES, dtype=jnp.float32)
    tgt = jnp.sum(onehot * answer_mask[:, :, None], axis=1)
    max_prob = jnp.max(prob * tgt, axis=1)
    return jnp.mean(-jnp.log(max_prob))


if __name__ == "__main__":
    key = jax.random.PRNGKey(0)
    B, S, C = 2, 8, NUM_CLASSES
    k1, k2, k3 = jax.random.split(key, 3)

    x = jax.random.normal(k1, (B, C), dtype=jnp.float32)
    target = jax.random.randint(k2, (B, S), 0, C, dtype=jnp.int32)
    answer_mask = (jax.random.uniform(k3, (B, S)) > 0.3).astype(jnp.float32)
    answer_mask = answer_mask.at[:, 0].set(1.0)  # avoid all-zero rows -> log(0)

    loss = maximize_loss(x, target, answer_mask)
    jax.block_until_ready(loss)

    ref = maximize_loss_ref(x, target, answer_mask)
    assert jnp.allclose(loss, ref, rtol=1e-5, atol=1e-6), (loss, ref)

    print("KERNEL_OK")
</pallas_src>

<mosaic_0001>
module attributes {stable_mosaic.version = 11 : i64} {
  func.func @maximize_loss_kernel(%arg0: i32, %arg1: memref<4x128xf32, #tpu.memory_space<vmem>>, %arg2: memref<8x128xi32, #tpu.memory_space<vmem>>, %arg3: memref<8x128xf32, #tpu.memory_space<vmem>>, %arg4: memref<1x128xf32, #tpu.memory_space<vmem>>) attributes {dimension_semantics = [#tpu.dimension_semantics<parallel>], iteration_bounds = array<i64: 1>, scalar_prefetch = 0 : i64, scratch_operands = 0 : i64, tpu.core_type = #tpu.core_type<tc>, window_params = [{transform_indices = @transform_0, window_bounds = array<i64: 4, 128>}, {transform_indices = @transform_1, window_bounds = array<i64: 8, 128>}, {transform_indices = @transform_2, window_bounds = array<i64: 8, 128>}, {transform_indices = @transform_3, window_bounds = array<i64: 1, 128>}]} {
    %c0 = arith.constant 0 : index
    %c0_0 = arith.constant 0 : index
    %0 = vector.load %arg1[%c0, %c0_0] : memref<4x128xf32, #tpu.memory_space<vmem>>, vector<4x128xf32>
    %c0_1 = arith.constant 0 : index
    %c0_2 = arith.constant 0 : index
    %1 = vector.load %arg2[%c0_1, %c0_2] : memref<8x128xi32, #tpu.memory_space<vmem>>, vector<8x128xi32>
    %c0_3 = arith.constant 0 : index
    %c0_4 = arith.constant 0 : index
    %2 = vector.load %arg3[%c0_3, %c0_4] : memref<8x128xf32, #tpu.memory_space<vmem>>, vector<8x128xf32>
    %cst = arith.constant dense<0xFF800000> : vector<128xf32>
    %3 = vector.multi_reduction <maximumf>, %0, %cst [0] : vector<4x128xf32> to vector<128xf32>
    %4 = vector.shape_cast %3 : vector<128xf32> to vector<1x128xf32>
    %5 = vector.broadcast %4 : vector<1x128xf32> to vector<4x128xf32>
    %6 = arith.subf %0, %5 : vector<4x128xf32>
    %7 = math.exp %6 : vector<4x128xf32>
    %cst_5 = arith.constant dense<0.000000e+00> : vector<128xf32>
    %8 = vector.multi_reduction <add>, %7, %cst_5 [0] : vector<4x128xf32> to vector<128xf32>
    %9 = vector.shape_cast %8 : vector<128xf32> to vector<1x128xf32>
    %c0_i32 = arith.constant 0 : i32
    %10 = vector.broadcast %c0_i32 : i32 to vector<8x128xi32>
    %11 = arith.cmpi eq, %1, %10 : vector<8x128xi32>
    %cst_6 = arith.constant 0.000000e+00 : f32
    %12 = vector.broadcast %cst_6 : f32 to vector<8x128xf32>
    %13 = arith.select %11, %2, %12 : vector<8x128xi1>, vector<8x128xf32>
    %cst_7 = arith.constant dense<0.000000e+00> : vector<128xf32>
    %14 = vector.multi_reduction <add>, %13, %cst_7 [0] : vector<8x128xf32> to vector<128xf32>
    %15 = vector.shape_cast %14 : vector<128xf32> to vector<1x128xf32>
    %16 = vector.extract_strided_slice %7 {offsets = [0, 0], sizes = [1, 128], strides = [1, 1]} : vector<4x128xf32> to vector<1x128xf32>
    %17 = arith.mulf %16, %15 : vector<1x128xf32>
    %c1_i32 = arith.constant 1 : i32
    %18 = vector.broadcast %c1_i32 : i32 to vector<8x128xi32>
    %19 = arith.cmpi eq, %1, %18 : vector<8x128xi32>
    %cst_8 = arith.constant 0.000000e+00 : f32
    %20 = vector.broadcast %cst_8 : f32 to vector<8x128xf32>
    %21 = arith.select %19, %2, %20 : vector<8x128xi1>, vector<8x128xf32>
    %cst_9 = arith.constant dense<0.000000e+00> : vector<128xf32>
    %22 = vector.multi_reduction <add>, %21, %cst_9 [0] : vector<8x128xf32> to vector<128xf32>
    %23 = vector.shape_cast %22 : vector<128xf32> to vector<1x128xf32>
    %24 = vector.extract_strided_slice %7 {offsets = [1, 0], sizes = [1, 128], strides = [1, 1]} : vector<4x128xf32> to vector<1x128xf32>
    %25 = arith.mulf %24, %23 : vector<1x128xf32>
    %26 = arith.maximumf %17, %25 : vector<1x128xf32>
    %c2_i32 = arith.constant 2 : i32
    %27 = vector.broadcast %c2_i32 : i32 to vector<8x128xi32>
    %28 = arith.cmpi eq, %1, %27 : vector<8x128xi32>
    %cst_10 = arith.constant 0.000000e+00 : f32
    %29 = vector.broadcast %cst_10 : f32 to vector<8x128xf32>
    %30 = arith.select %28, %2, %29 : vector<8x128xi1>, vector<8x128xf32>
    %cst_11 = arith.constant dense<0.000000e+00> : vector<128xf32>
    %31 = vector.multi_reduction <add>, %30, %cst_11 [0] : vector<8x128xf32> to vector<128xf32>
    %32 = vector.shape_cast %31 : vector<128xf32> to vector<1x128xf32>
    %33 = vector.extract_strided_slice %7 {offsets = [2, 0], sizes = [1, 128], strides = [1, 1]} : vector<4x128xf32> to vector<1x128xf32>
    %34 = arith.mulf %33, %32 : vector<1x128xf32>
    %35 = arith.maximumf %26, %34 : vector<1x128xf32>
    %c3_i32 = arith.constant 3 : i32
    %36 = vector.broadcast %c3_i32 : i32 to vector<8x128xi32>
    %37 = arith.cmpi eq, %1, %36 : vector<8x128xi32>
    %cst_12 = arith.constant 0.000000e+00 : f32
    %38 = vector.broadcast %cst_12 : f32 to vector<8x128xf32>
    %39 = arith.select %37, %2, %38 : vector<8x128xi1>, vector<8x128xf32>
    %cst_13 = arith.constant dense<0.000000e+00> : vector<128xf32>
    %40 = vector.multi_reduction <add>, %39, %cst_13 [0] : vector<8x128xf32> to vector<128xf32>
    %41 = vector.shape_cast %40 : vector<128xf32> to vector<1x128xf32>
    %42 = vector.extract_strided_slice %7 {offsets = [3, 0], sizes = [1, 128], strides = [1, 1]} : vector<4x128xf32> to vector<1x128xf32>
    %43 = arith.mulf %42, %41 : vector<1x128xf32>
    %44 = arith.maximumf %35, %43 : vector<1x128xf32>
    %45 = math.log %9 : vector<1x128xf32>
    %46 = math.log %44 : vector<1x128xf32>
    %47 = arith.subf %45, %46 : vector<1x128xf32>
    %48 = tpu.iota {dimensions = array<i32: 1>} : vector<1x128xi32>
    %c128_i32 = arith.constant 128 : i32
    %49 = arith.muli %arg0, %c128_i32 : i32
    %50 = vector.broadcast %49 : i32 to vector<1x128xi32>
    %51 = arith.addi %50, %48 : vector<1x128xi32>
    %c2_i32_14 = arith.constant 2 : i32
    %52 = vector.broadcast %c2_i32_14 : i32 to vector<1x128xi32>
    %53 = arith.cmpi slt, %51, %52 : vector<1x128xi32>
    %cst_15 = arith.constant 0.000000e+00 : f32
    %54 = vector.broadcast %cst_15 : f32 to vector<1x128xf32>
    %55 = arith.select %53, %47, %54 : vector<1x128xi1>, vector<1x128xf32>
    %c0_16 = arith.constant 0 : index
    %c0_17 = arith.constant 0 : index
    %56 = vector.load %arg4[%c0_16, %c0_17] : memref<1x128xf32, #tpu.memory_space<vmem>>, vector<1x128xf32>
    tpu.vector_store %arg4[%c0_16, %c0_17], %55 {strides = array<i32>} : memref<1x128xf32, #tpu.memory_space<vmem>>, vector<1x128xf32>,
    return
  }
  func.func @transform_0(%arg0: i32) -> (i32, i32) {
    %c0_i32 = arith.constant 0 : i32
    %c0_i32_0 = arith.constant 0 : i32
    return %c0_i32, %arg0 : i32, i32
  }
  func.func @transform_1(%arg0: i32) -> (i32, i32) {
    %c0_i32 = arith.constant 0 : i32
    %c0_i32_0 = arith.constant 0 : i32
    return %c0_i32, %arg0 : i32, i32
  }
  func.func @transform_2(%arg0: i32) -> (i32, i32) {
    %c0_i32 = arith.constant 0 : i32
    %c0_i32_0 = arith.constant 0 : i32
    return %c0_i32, %arg0 : i32, i32
  }
  func.func @transform_3(%arg0: i32) -> (i32, i32) {
    %c0_i32 = arith.constant 0 : i32
    %c0_i32_0 = arith.constant 0 : i32
    return %c0_i32, %arg0 : i32, i32
  }
}

</mosaic_0001>

<llo_original>
// kernel: tpu_custom_call.1
$region0: #{tpu_custom_call.1}
  #allocation0 [shape = 'u32[]', space=smem, size = 0x4, offset = 0x4, fixed_abs, tag = 'smem constant byte address 0x4 - core index']
  #allocation1 [shape = 'u32[144,128]{1,0:T(1,128)}', space=vmem, size = 0x12000, scoped, tag = 'internal scratch']
  %s0 = inlined_call_operand.hbm [shape: f32[4,128], index: 0, kind: input, shape index: {}]
  %s1 = inlined_call_operand.hbm [shape: s32[8,128], index: 1, kind: input, shape index: {}]
  %s2 = inlined_call_operand.hbm [shape: f32[8,128], index: 2, kind: input, shape index: {}]
  %s3 = inlined_call_operand.hbm [shape: f32[1,128], index: 3, kind: output, shape index: {}]
  %s4 = sld [smem:[#allocation0]]
  $region34: #{tpu_custom_call.1} parent=0
    _
  %s6 = ssub.s32 1, %s4
  %s7 = scalar_select 0, %s6, %s4
  $region1: #{tpu_custom_call.1} parent=0
    #allocation2 [shape = 'u8[2048]{0}', space=vmem, size = 0x800, scoped, tag = 'input window, operand 0, single buffered']
    #allocation3 [shape = 's32[1]{0}', space=sflag, size = 0x4, scoped, tag = 'scoped memory for tpu_custom_call.1']
    #allocation4 [shape = 's32[1]{0}', space=sflag, size = 0x4, scoped, tag = 'scoped memory for tpu_custom_call.1']
    #allocation5 [shape = 'u8[4096]{0}', space=vmem, size = 0x1000, scoped, tag = 'input window, operand 1, single buffered']
    #allocation6 [shape = 's32[1]{0}', space=sflag, size = 0x4, scoped, tag = 'scoped memory for tpu_custom_call.1']
    #allocation7 [shape = 'u8[4096]{0}', space=vmem, size = 0x1000, scoped, tag = 'input window, operand 2, single buffered']
    #allocation8 [shape = 'u8[512]{0}', space=vmem, size = 0x400, scoped, tag = 'output window, operand 0, single buffered']
    %8 = vsyncpa [#allocation3], 0
    %9 = vsyncpa [#allocation6], 0
    %10 = vsyncpa [#allocation4], 0
    // Predicated region
    $region2: #{tpu_custom_call.1} parent=1 // pred_check
      _
    $region3: #{tpu_custom_call.1} parent=1 // pred_check_branch
      %12 = sbr.rel (0) target = $region5
    $region4: #{tpu_custom_call.1} parent=1 // pred_region
      %s14 = ssub.s32 64, 64
      %15 = vsyncadd [#allocation3], %s14
      %s17 = sshll.u32 [#allocation2], 4
      %s18 = int_to_ptr.vmem [resolvable:$true] %s17
      %20 = dma.hbm_to_vmem [thread:$0]  %s0, 64, %s18, [#allocation3]
    $region5: #{tpu_custom_call.1} parent=1 // pred_fallthru
      _
    // Predicated region
    $region6: #{tpu_custom_call.1} parent=1 // pred_check
      _
    $region7: #{tpu_custom_call.1} parent=1 // pred_check_branch
      %22 = sbr.rel (0) target = $region9
    $region8: #{tpu_custom_call.1} parent=1 // pred_region
      %s24 = ssub.s32 128, 128
      %25 = vsyncadd [#allocation6], %s24
      %s27 = sshll.u32 [#allocation5], 4
      %s28 = int_to_ptr.vmem [resolvable:$true] %s27
      %30 = dma.hbm_to_vmem [thread:$0]  %s1, 128, %s28, [#allocation6]
    $region9: #{tpu_custom_call.1} parent=1 // pred_fallthru
      _
    // Predicated region
    $region10: #{tpu_custom_call.1} parent=1 // pred_check
      _
    $region11: #{tpu_custom_call.1} parent=1 // pred_check_branch
      %32 = sbr.rel (0) target = $region13
    $region12: #{tpu_custom_call.1} parent=1 // pred_region
      %s34 = ssub.s32 128, 128
      %35 = vsyncadd [#allocation6], %s34
      %s37 = sshll.u32 [#allocation7], 4
      %s38 = int_to_ptr.vmem [resolvable:$true] %s37
      %40 = dma.hbm_to_vmem [thread:$0]  %s2, 128, %s38, [#allocation6]
    $region13: #{tpu_custom_call.1} parent=1 // pred_fallthru
      _
    // Predicated region
    $region14: #{tpu_custom_call.1} parent=1 // pred_check
      _
    $region15: #{tpu_custom_call.1} parent=1 // pred_check_branch
      %42 = sbr.rel (0) target = $region17
    $region16: #{tpu_custom_call.1} parent=1 // pred_region
      %43 = dma.done [#allocation3], 64
    $region17: #{tpu_custom_call.1} parent=1 // pred_fallthru
      _
    // Predicated region
    $region18: #{tpu_custom_call.1} parent=1 // pred_check
      _
    $region19: #{tpu_custom_call.1} parent=1 // pred_check_branch
      %45 = sbr.rel (0) target = $region21
    $region20: #{tpu_custom_call.1} parent=1 // pred_region
      %46 = dma.done [#allocation6], 128
    $region21: #{tpu_custom_call.1} parent=1 // pred_fallthru
      _
    // Predicated region
    $region22: #{tpu_custom_call.1} parent=1 // pred_check
      _
    $region23: #{tpu_custom_call.1} parent=1 // pred_check_branch
      %48 = sbr.rel (0) target = $region25
    $region24: #{tpu_custom_call.1} parent=1 // pred_region
      %49 = dma.done [#allocation6], 128
    $region25: #{tpu_custom_call.1} parent=1 // pred_fallthru
      _
    %v50 = vld [vmem:[#allocation2] sm:$0xf]
    %v51 = vld [vmem:[#allocation5] sm:$0xff]
    %v52 = vld [vmem:[#allocation7] sm:$0xff]
    %vm53 = vcmask 1043456
    %v54 = vsel %vm53, %v50, -inf
    %v55 = vrot.slane %v54, 4
    %v56 = vmax.f32 %v54, %v55
    %v57 = vrot.slane %v56, 2
    %v58 = vmax.f32 %v56, %v57
    %v59 = vrot.slane %v58, 1
    %v60 = vmax.f32 %v58, %v59
    %v61 = vsub.f32 %v50, %v60
    %v62 = vmul.f32 %v61, 1.442695
    %v63 = vpow.pop %v62
    %v64 = vsel %vm53, %v63, 0.0
    %v65 = vrot.slane %v64, 4
    %v66 = vadd.f32 %v64, %v65
    %v67 = vrot.slane %v66, 2
    %v68 = vadd.f32 %v66, %v67
    %v69 = vrot.slane %v68, 1
    %v70 = vadd.f32 %v68, %v69
    %vm71 = vcmp.eq.s32.totalorder %v51, 0
    %v72 = vsel %vm71, %v52, 0.0
    %v73 = vrot.slane %v72, 4
    %v74 = vadd.f32 %v72, %v73
    %v75 = vrot.slane %v74, 2
    %v76 = vadd.f32 %v74, %v75
    %v77 = vrot.slane %v76, 1
    %v78 = vadd.f32 %v76, %v77
    %v79 = vmul.f32 %v63, %v78
    %vm80 = vcmp.eq.s32.totalorder %v51, 1
    %v81 = vsel %vm80, %v52, 0.0
    %v82 = vrot.slane %v81, 4
    %v83 = vadd.f32 %v81, %v82
    %v84 = vrot.slane %v83, 2
    %v85 = vadd.f32 %v83, %v84
    %v86 = vrot.slane %v85, 1
    %v87 = vadd.f32 %v85, %v86
    %v88 = vmul.f32 %v63, %v87
    %v90 = vrot.slane %v88, 1
    %v92 = vmax.f32 %v79, %v90
    %vm93 = vcmp.eq.s32.totalorder %v51, 2
    %v94 = vsel %vm93, %v52, 0.0
    %v95 = vrot.slane %v94, 4
    %v96 = vadd.f32 %v94, %v95
    %v97 = vrot.slane %v96, 2
    %v98 = vadd.f32 %v96, %v97
    %v99 = vrot.slane %v98, 1
    %v100 = vadd.f32 %v98, %v99
    %v101 = vmul.f32 %v63, %v100
    %v103 = vrot.slane %v101, 2
    %v105 = vmax.f32 %v92, %v103
    %vm106 = vcmp.eq.s32.totalorder %v51, 3
    %v107 = vsel %vm106, %v52, 0.0
    %v108 = vrot.slane %v107, 4
    %v109 = vadd.f32 %v107, %v108
    %v110 = vrot.slane %v109, 2
    %v111 = vadd.f32 %v109, %v110
    %v112 = vrot.slane %v111, 1
    %v113 = vadd.f32 %v111, %v112
    %v114 = vmul.f32 %v63, %v113
    %v116 = vrot.slane %v114, 3
    %v118 = vmax.f32 %v105, %v116
    %v119 = vlog2.pop %v70
    %v120 = vmul.f32 %v119, 0.6931472
    %v121 = vlog2.pop %v118
    %v122 = vmul.f32 %v121, 0.6931472
    %v123 = vsub.f32 %v120, %v122
    %v124 = vlaneseq
    %v125 = vand.u32 %v124, 127
    %s126 = smul.u32 0, 128
    %v127 = vstv %s126
    %v128 = vadd.s32 %v127, %v125
    %vm129 = vcmp.lt.s32.totalorder %v128, 2
    %v130 = vsel %vm129, %v123, 0.0
    %131 = vst [vmem:[#allocation8] sm:$0x1] %v130
    // Predicated region
    $region26: #{tpu_custom_call.1} parent=1 // pred_check
      _
    $region27: #{tpu_custom_call.1} parent=1 // pred_check_branch
      %133 = sbr.rel (0) target = $region29
    $region28: #{tpu_custom_call.1} parent=1 // pred_region
      %s135 = ssub.s32 16, 16
      %136 = vsyncadd [#allocation4], %s135
      %s138 = sshll.u32 [#allocation8], 4
      %s139 = int_to_ptr.vmem [resolvable:$true] %s138
      %141 = dma.vmem_to_hbm [thread:$0]  %s139, 16, %s3, [#allocation4]
    $region29: #{tpu_custom_call.1} parent=1 // pred_fallthru
      _
    // Predicated region
    $region30: #{tpu_custom_call.1} parent=1 // pred_check
      _
    $region31: #{tpu_custom_call.1} parent=1 // pred_check_branch
      %143 = sbr.rel (0) target = $region33
    $region32: #{tpu_custom_call.1} parent=1 // pred_region
      %144 = dma.done [#allocation4], 16
    $region33: #{tpu_custom_call.1} parent=1 // pred_fallthru
      _
    %145 = vsyncpa [#allocation3], 1
    %146 = vsyncpa [#allocation6], 1
    %147 = vsyncpa [#allocation4], 1

</llo_original>
